<compile_context>
chip_gen: v6e
topology: v6e:2x2x1
jax: 0.10.0
libtpu: 0.0.40
codegen_flags: <defaults>
</compile_context>

<pallas_src>
import numpy as np
import jax
import jax.numpy as jnp
from jax.experimental import pallas as pl
from jax.experimental.pallas import tpu as pltpu

ALPHA = 0.01          # Dynamics(alpha=0.01) (only used by the dead `rv` path)
PROJFN_EPS = 0.01     # MakePSD eps
D_OUTER = 1.0         # MakePSD ReHU(d=1.0)
D_INNER = 0.01        # inner ReHU(0.01) at the end of the V sequential
_LANES = 128


def _rehu(x, d):
    # ReHU: max(min((0.5/d) * relu(x)^2, d/2), x - d/2)
    r = jnp.maximum(x, 0.0)
    return jnp.maximum(jnp.minimum((0.5 / d) * r * r, 0.5 * d), x - 0.5 * d)


def _rehu_grad(x, d):
    # derivative of ReHU: 0 for x<=0, x/d for 0<x<d, 1 for x>=d
    return jnp.clip(x / d, 0.0, 1.0)


def _round_up(n, m):
    return ((n + m - 1) // m) * m


def _slab_layout(lsd, ph):
    r_p1 = 0
    r_p2 = r_p1 + _round_up(lsd, 8)
    r_p2t = r_p2 + _round_up(ph, 8)
    r_p1t = r_p2t + _round_up(ph, 8)
    r_vec = r_p1t + _round_up(ph, 8)
    n_rows = r_vec + 8
    return dict(r_p1=r_p1, r_p2=r_p2, r_p2t=r_p2t, r_p1t=r_p1t,
                r_vec=r_vec, n_rows=n_rows)


def pack_params(params):
    """Pack all V-network parameters into one (n_rows, 128) f32 slab.

    Built once with numpy at parameter-construction time so the per-call
    wrapper does zero XLA work; the kernel slices it with static offsets.
    Rows (lsd=8, ph=40):
      [  0:  8]  p1    (lsd, ph)   cols [0:ph]
      [  8: 48]  p2    (ph,  ph)   cols [0:ph]
      [ 48: 88]  p2^T  (ph,  ph)   cols [0:ph]
      [ 88:128]  p1^T  (ph, lsd)   cols [0:lsd]
      [128]      c1    cols [0:ph]
      [129]      c2    cols [0:ph]
      [130]      p3 row cols [0:ph]
      [131]      c3    col 0
      [132]      zero  col 0
    """
    p1 = np.asarray(params["p1"], np.float32)      # (lsd, ph)
    c1 = np.asarray(params["c1"], np.float32)      # (1, ph)
    p2 = np.asarray(params["p2"], np.float32)      # (ph, ph)
    c2 = np.asarray(params["c2"], np.float32)      # (1, ph)
    p3 = np.asarray(params["p3"], np.float32)      # (ph, 1)
    c3 = np.asarray(params["c3"], np.float32)      # (1, 1)
    zero = np.asarray(params["zero"], np.float32)  # (1, 1)
    lsd, ph = p1.shape
    L = _slab_layout(lsd, ph)
    slab = np.zeros((L["n_rows"], _LANES), np.float32)
    slab[L["r_p1"]:L["r_p1"] + lsd, :ph] = p1
    slab[L["r_p2"]:L["r_p2"] + ph, :ph] = p2
    slab[L["r_p2t"]:L["r_p2t"] + ph, :ph] = p2.T
    slab[L["r_p1t"]:L["r_p1t"] + ph, :lsd] = p1.T
    slab[L["r_vec"] + 0, :ph] = c1[0]
    slab[L["r_vec"] + 1, :ph] = c2[0]
    slab[L["r_vec"] + 2, :ph] = p3[:, 0]
    slab[L["r_vec"] + 3, 0] = c3[0, 0]
    slab[L["r_vec"] + 4, 0] = zero[0, 0]
    return jnp.asarray(slab)


def _make_kernel(B, lsd, ph, L):
    r_p1, r_p2 = L["r_p1"], L["r_p2"]
    r_p2t, r_p1t, r_vec = L["r_p2t"], L["r_p1t"], L["r_vec"]

    def kernel(x_ref, g_ref, w_ref, out_ref, xcat_ref):
        x = x_ref[...]
        g = g_ref[...]

        # xcat = [x ; |x - g|] via VMEM scratch stores (avoids the XLU sublane
        # concat directly in front of the first matmul).
        xcat_ref[0:B, :] = x
        xcat_ref[B:2 * B, :] = jnp.abs(x - g)
        xcat = xcat_ref[...]                                             # (2B, lsd)

        # Static slices into the packed parameter slab (single DMA'd input).
        p1 = w_ref[r_p1:r_p1 + lsd, 0:ph]                                # (lsd, ph)
        p2 = w_ref[r_p2:r_p2 + ph, 0:ph]                                 # (ph, ph)
        p2t = w_ref[r_p2t:r_p2t + ph, 0:ph]                              # (ph, ph)
        p1t = w_ref[r_p1t:r_p1t + ph, 0:lsd]                             # (ph, lsd)
        c1 = w_ref[r_vec + 0:r_vec + 1, 0:ph]                            # (1, ph)
        c2 = w_ref[r_vec + 1:r_vec + 2, 0:ph]                            # (1, ph)
        p3r = w_ref[r_vec + 2:r_vec + 3, 0:ph]                           # (1, ph)
        c3 = w_ref[r_vec + 3:r_vec + 4, 0:1]                             # (1, 1)
        zero = w_ref[r_vec + 4:r_vec + 5, 0:1]                           # (1, 1)

        # ---- fused V forward over [x ; |x-g|] (one batched pass) ----
        z1 = jnp.dot(xcat, p1, preferred_element_type=jnp.float32) + c1  # (2B, ph)
        a1 = jnp.maximum(z1, 0.0)
        z2 = jnp.dot(a1, p2, preferred_element_type=jnp.float32) + c2    # (2B, ph)
        a2 = jnp.maximum(z2, 0.0)
        # N=1 matmul replaced by VPU multiply + cross-lane reduce
        z3 = jnp.sum(a2 * p3r, axis=1, keepdims=True) + c3               # (2B, 1)
        f = _rehu(z3, D_INNER)
        s = f - zero
        v = _rehu(s, D_OUTER) + PROJFN_EPS * jnp.sum(xcat * xcat, axis=1,
                                                     keepdims=True)

        vx = v[0:B]                                                      # V(x)
        vx0 = v[B:2 * B]                                                 # V(|x-g|)

        # ---- analytic gV = dV(x)/dx (x half only) ----
        u = _rehu_grad(s[0:B], D_OUTER) * _rehu_grad(z3[0:B], D_INNER)   # (B, 1)
        ga2 = u * p3r                                                    # (B, ph)
        gz2 = jnp.where(z2[0:B] > 0.0, ga2, 0.0)
        ga1 = jnp.dot(gz2, p2t, preferred_element_type=jnp.float32)      # (B, ph)
        gz1 = jnp.where(z1[0:B] > 0.0, ga1, 0.0)
        gv = jnp.dot(gz1, p1t, preferred_element_type=jnp.float32) \
            + (2.0 * PROJFN_EPS) * x                                     # (B, lsd)

        # ---- Lyapunov_risk = mean(relu(-Vx) + 2*relu(gV)) + 10*sum(X0^2) ----
        term = jnp.maximum(-vx, 0.0) + 2.0 * jnp.maximum(gv, 0.0)        # (B, lsd)
        risk = jnp.sum(term) * (1.0 / (B * lsd)) + 10.0 * jnp.sum(vx0 * vx0)

        out_ref[0, 0] = risk                                             # SMEM scalar

    return kernel


def dynamics_forward(x, g, slab, ph_dim):
    B, lsd = x.shape
    L = _slab_layout(lsd, ph_dim)
    assert slab.shape == (L["n_rows"], _LANES), slab.shape
    kernel = _make_kernel(B, lsd, ph_dim, L)

    # Advisory cost estimate so XLA can schedule around the custom call.
    flops = (2 * (2 * B) * lsd * ph_dim        # xcat @ p1
             + 2 * (2 * B) * ph_dim * ph_dim   # a1 @ p2
             + 2 * (2 * B) * ph_dim            # z3 reduce
             + 2 * B * ph_dim * ph_dim         # gz2 @ p2^T
             + 2 * B * ph_dim * lsd)           # gz1 @ p1^T
    bytes_accessed = 4 * (x.size + g.size + slab.size + 1)

    out = pl.pallas_call(
        kernel,
        out_shape=jax.ShapeDtypeStruct((1, 1), jnp.float32),
        in_specs=[pl.BlockSpec(memory_space=pltpu.MemorySpace.VMEM)] * 3,
        out_specs=pl.BlockSpec(memory_space=pltpu.MemorySpace.SMEM),
        scratch_shapes=[pltpu.VMEM((2 * B, lsd), jnp.float32)],
        cost_estimate=pl.CostEstimate(flops=flops, transcendentals=0,
                                      bytes_accessed=bytes_accessed),
    )(x, g, slab)
    return out[0, 0]


# ---------------- parameter init (deterministic, torch-Linear-like) ----------------
def _linear_params(key, fan_in, fan_out):
    kw, kb = jax.random.split(key)
    bound = 1.0 / np.sqrt(fan_in)
    w = jax.random.uniform(kw, (fan_in, fan_out), jnp.float32, -bound, bound)
    b = jax.random.uniform(kb, (1, fan_out), jnp.float32, -bound, bound)
    return w, b


def make_params(key, lsd=8, ph_dim=40):
    # Only the V network parameters are needed: the fhat MLP never affects the
    # returned Lyapunov_risk (SCALE_FX=False, VERIFY=False).
    keys = jax.random.split(key, 3)
    p1, c1 = _linear_params(keys[0], lsd, ph_dim)
    p2, c2 = _linear_params(keys[1], ph_dim, ph_dim)
    p3, c3 = _linear_params(keys[2], ph_dim, 1)

    # MakePSD.zero = f(zeros(1, lsd)), f = V sequential (incl. inner ReHU)
    zin = jnp.zeros((1, lsd), jnp.float32)
    z1 = jnp.maximum(zin @ p1 + c1, 0.0)
    z2 = jnp.maximum(z1 @ p2 + c2, 0.0)
    z3 = z2 @ p3 + c3
    zero = _rehu(z3, D_INNER)

    return dict(p1=p1, c1=c1, p2=p2, c2=c2, p3=p3, c3=c3, zero=zero)


# ---------------- pure-JAX reference (uses jax.grad for gV) ----------------
def reference_forward(x, g, params):
    p1, c1, p2, c2, p3, c3, zero = (params["p1"], params["c1"], params["p2"],
                                    params["c2"], params["p3"], params["c3"],
                                    params["zero"])

    def V_fn(xb):
        z1 = jnp.maximum(xb @ p1 + c1, 0.0)
        z2 = jnp.maximum(z1 @ p2 + c2, 0.0)
        z3 = z2 @ p3 + c3
        f = _rehu(z3, D_INNER)
        return _rehu(f - zero, D_OUTER) + PROJFN_EPS * jnp.sum(xb * xb, axis=1,
                                                               keepdims=True)

    x0 = jnp.abs(x - g)
    vx = V_fn(x)
    gv = jax.grad(lambda xx: jnp.sum(V_fn(xx)))(x)
    vx0 = V_fn(x0)
    return jnp.mean(jax.nn.relu(-vx) + 2.0 * jax.nn.relu(gv)) + 10.0 * jnp.sum(vx0 ** 2)


if __name__ == "__main__":
    B, LSD, PH_DIM = 4, 8, 40

    key = jax.random.PRNGKey(0)
    kx, kg, kp = jax.random.split(key, 3)
    x = jax.random.normal(kx, (B, LSD), jnp.float32)
    g = jax.random.normal(kg, (B, LSD), jnp.float32)
    params = make_params(kp, lsd=LSD, ph_dim=PH_DIM)
    slab = pack_params(params)

    risk = dynamics_forward(x, g, slab, PH_DIM)
    risk = jax.block_until_ready(risk)

    risk_ref = jax.block_until_ready(reference_forward(x, g, params))
    np.testing.assert_allclose(np.asarray(risk), np.asarray(risk_ref),
                               rtol=1e-4, atol=1e-4)

    print("KERNEL_OK")
</pallas_src>

<mosaic_0001>
module attributes {stable_mosaic.version = 11 : i64} {
  func.func @kernel(%arg0: memref<4x8xf32, #tpu.memory_space<vmem>>, %arg1: memref<4x8xf32, #tpu.memory_space<vmem>>, %arg2: memref<136x128xf32, #tpu.memory_space<vmem>>, %arg3: memref<1x1xf32, #tpu.memory_space<smem>>, %arg4: memref<8x8xf32, #tpu.memory_space<vmem>>) attributes {dimension_semantics = [], scalar_prefetch = 0 : i64, scratch_operands = 1 : i64, tpu.core_type = #tpu.core_type<tc>} {
    %c0 = arith.constant 0 : index
    %c0_0 = arith.constant 0 : index
    %0 = vector.load %arg0[%c0, %c0_0] : memref<4x8xf32, #tpu.memory_space<vmem>>, vector<4x8xf32>
    %c0_1 = arith.constant 0 : index
    %c0_2 = arith.constant 0 : index
    %1 = vector.load %arg1[%c0_1, %c0_2] : memref<4x8xf32, #tpu.memory_space<vmem>>, vector<4x8xf32>
    %c0_3 = arith.constant 0 : index
    %c0_4 = arith.constant 0 : index
    %2 = vector.load %arg4[%c0_3, %c0_4] : memref<8x8xf32, #tpu.memory_space<vmem>>, vector<4x8xf32>
    tpu.vector_store %arg4[%c0_3, %c0_4], %0 {strides = array<i32>} : memref<8x8xf32, #tpu.memory_space<vmem>>, vector<4x8xf32>,
    %3 = arith.subf %0, %1 : vector<4x8xf32>
    %4 = math.absf %3 : vector<4x8xf32>
    %c4 = arith.constant 4 : index
    %c0_5 = arith.constant 0 : index
    %5 = vector.load %arg4[%c4, %c0_5] : memref<8x8xf32, #tpu.memory_space<vmem>>, vector<4x8xf32>
    tpu.vector_store %arg4[%c4, %c0_5], %4 {strides = array<i32>} : memref<8x8xf32, #tpu.memory_space<vmem>>, vector<4x8xf32>,
    %c0_6 = arith.constant 0 : index
    %c0_7 = arith.constant 0 : index
    %6 = vector.load %arg4[%c0_6, %c0_7] : memref<8x8xf32, #tpu.memory_space<vmem>>, vector<8x8xf32>
    %c0_8 = arith.constant 0 : index
    %c0_9 = arith.constant 0 : index
    %7 = vector.load %arg2[%c0_8, %c0_9] : memref<136x128xf32, #tpu.memory_space<vmem>>, vector<8x40xf32>
    %c8 = arith.constant 8 : index
    %c0_10 = arith.constant 0 : index
    %8 = vector.load %arg2[%c8, %c0_10] : memref<136x128xf32, #tpu.memory_space<vmem>>, vector<40x40xf32>
    %c48 = arith.constant 48 : index
    %c0_11 = arith.constant 0 : index
    %9 = vector.load %arg2[%c48, %c0_11] : memref<136x128xf32, #tpu.memory_space<vmem>>, vector<40x40xf32>
    %c88 = arith.constant 88 : index
    %c0_12 = arith.constant 0 : index
    %10 = vector.load %arg2[%c88, %c0_12] : memref<136x128xf32, #tpu.memory_space<vmem>>, vector<40x8xf32>
    %c128 = arith.constant 128 : index
    %c0_13 = arith.constant 0 : index
    %11 = vector.load %arg2[%c128, %c0_13] : memref<136x128xf32, #tpu.memory_space<vmem>>, vector<1x40xf32>
    %c129 = arith.constant 129 : index
    %c0_14 = arith.constant 0 : index
    %12 = vector.load %arg2[%c129, %c0_14] : memref<136x128xf32, #tpu.memory_space<vmem>>, vector<1x40xf32>
    %c130 = arith.constant 130 : index
    %c0_15 = arith.constant 0 : index
    %13 = vector.load %arg2[%c130, %c0_15] : memref<136x128xf32, #tpu.memory_space<vmem>>, vector<1x40xf32>
    %c131 = arith.constant 131 : index
    %c0_16 = arith.constant 0 : index
    %14 = vector.load %arg2[%c131, %c0_16] : memref<136x128xf32, #tpu.memory_space<vmem>>, vector<1x1xf32>
    %c132 = arith.constant 132 : index
    %c0_17 = arith.constant 0 : index
    %15 = vector.load %arg2[%c132, %c0_17] : memref<136x128xf32, #tpu.memory_space<vmem>>, vector<1x1xf32>
    %cst = arith.constant dense<0.000000e+00> : vector<8x40xf32>
    %16 = tpu.matmul %6, %7, %cst {dimension_numbers = #tpu.dot_dimension_numbers<[1], [0], [0], [1], [0, 0, 1, 1], [], []>} : vector<8x8xf32>, vector<8x40xf32>, vector<8x40xf32> -> vector<8x40xf32>
    %17 = vector.broadcast %11 : vector<1x40xf32> to vector<8x40xf32>
    %18 = arith.addf %16, %17 : vector<8x40xf32>
    %cst_18 = arith.constant 0.000000e+00 : f32
    %19 = vector.broadcast %cst_18 : f32 to vector<8x40xf32>
    %20 = arith.maximumf %18, %19 : vector<8x40xf32>
    %cst_19 = arith.constant dense<0.000000e+00> : vector<8x40xf32>
    %21 = tpu.matmul %20, %8, %cst_19 {dimension_numbers = #tpu.dot_dimension_numbers<[1], [0], [0], [1], [0, 0, 1, 1], [], []>} : vector<8x40xf32>, vector<40x40xf32>, vector<8x40xf32> -> vector<8x40xf32>
    %22 = vector.broadcast %12 : vector<1x40xf32> to vector<8x40xf32>
    %23 = arith.addf %21, %22 : vector<8x40xf32>
    %cst_20 = arith.constant 0.000000e+00 : f32
    %24 = vector.broadcast %cst_20 : f32 to vector<8x40xf32>
    %25 = arith.maximumf %23, %24 : vector<8x40xf32>
    %26 = vector.broadcast %13 : vector<1x40xf32> to vector<8x40xf32>
    %27 = arith.mulf %25, %26 : vector<8x40xf32>
    %cst_21 = arith.constant dense<0.000000e+00> : vector<8xf32>
    %28 = vector.multi_reduction <add>, %27, %cst_21 [1] : vector<8x40xf32> to vector<8xf32>
    %29 = vector.shape_cast %28 : vector<8xf32> to vector<8x1xf32>
    %30 = vector.broadcast %14 : vector<1x1xf32> to vector<8x1xf32>
    %31 = arith.addf %29, %30 : vector<8x1xf32>
    %cst_22 = arith.constant 0.000000e+00 : f32
    %32 = vector.broadcast %cst_22 : f32 to vector<8x1xf32>
    %33 = arith.maximumf %31, %32 : vector<8x1xf32>
    %cst_23 = arith.constant 5.000000e+01 : f32
    %34 = vector.broadcast %cst_23 : f32 to vector<8x1xf32>
    %35 = arith.mulf %34, %33 : vector<8x1xf32>
    %36 = arith.mulf %35, %33 : vector<8x1xf32>
    %cst_24 = arith.constant 5.000000e-03 : f32
    %37 = vector.broadcast %cst_24 : f32 to vector<8x1xf32>
    %38 = arith.minimumf %36, %37 : vector<8x1xf32>
    %cst_25 = arith.constant 5.000000e-03 : f32
    %39 = vector.broadcast %cst_25 : f32 to vector<8x1xf32>
    %40 = arith.subf %31, %39 : vector<8x1xf32>
    %41 = arith.maximumf %38, %40 : vector<8x1xf32>
    %42 = vector.broadcast %15 : vector<1x1xf32> to vector<8x1xf32>
    %43 = arith.subf %41, %42 : vector<8x1xf32>
    %cst_26 = arith.constant 0.000000e+00 : f32
    %44 = vector.broadcast %cst_26 : f32 to vector<8x1xf32>
    %45 = arith.maximumf %43, %44 : vector<8x1xf32>
    %cst_27 = arith.constant 5.000000e-01 : f32
    %46 = vector.broadcast %cst_27 : f32 to vector<8x1xf32>
    %47 = arith.mulf %46, %45 : vector<8x1xf32>
    %48 = arith.mulf %47, %45 : vector<8x1xf32>
    %cst_28 = arith.constant 5.000000e-01 : f32
    %49 = vector.broadcast %cst_28 : f32 to vector<8x1xf32>
    %50 = arith.minimumf %48, %49 : vector<8x1xf32>
    %cst_29 = arith.constant 5.000000e-01 : f32
    %51 = vector.broadcast %cst_29 : f32 to vector<8x1xf32>
    %52 = arith.subf %43, %51 : vector<8x1xf32>
    %53 = arith.maximumf %50, %52 : vector<8x1xf32>
    %54 = arith.mulf %6, %6 : vector<8x8xf32>
    %cst_30 = arith.constant dense<0.000000e+00> : vector<8xf32>
    %55 = vector.multi_reduction <add>, %54, %cst_30 [1] : vector<8x8xf32> to vector<8xf32>
    %56 = vector.shape_cast %55 : vector<8xf32> to vector<8x1xf32>
    %cst_31 = arith.constant 0.00999999977 : f32
    %57 = vector.broadcast %cst_31 : f32 to vector<8x1xf32>
    %58 = arith.mulf %57, %56 : vector<8x1xf32>
    %59 = arith.addf %53, %58 : vector<8x1xf32>
    %60 = vector.extract_strided_slice %59 {offsets = [0, 0], sizes = [4, 1], strides = [1, 1]} : vector<8x1xf32> to vector<4x1xf32>
    %61 = vector.extract_strided_slice %59 {offsets = [4, 0], sizes = [4, 1], strides = [1, 1]} : vector<8x1xf32> to vector<4x1xf32>
    %62 = vector.extract_strided_slice %43 {offsets = [0, 0], sizes = [4, 1], strides = [1, 1]} : vector<8x1xf32> to vector<4x1xf32>
    %cst_32 = arith.constant 1.000000e+00 : f32
    %63 = vector.broadcast %cst_32 : f32 to vector<4x1xf32>
    %64 = arith.divf %62, %63 : vector<4x1xf32>
    %cst_33 = arith.constant 0.000000e+00 : f32
    %cst_34 = arith.constant 1.000000e+00 : f32
    %65 = vector.broadcast %cst_33 : f32 to vector<4x1xf32>
    %66 = arith.maximumf %65, %64 : vector<4x1xf32>
    %67 = vector.broadcast %cst_34 : f32 to vector<4x1xf32>
    %68 = arith.minimumf %67, %66 : vector<4x1xf32>
    %69 = vector.extract_strided_slice %31 {offsets = [0, 0], sizes = [4, 1], strides = [1, 1]} : vector<8x1xf32> to vector<4x1xf32>
    %cst_35 = arith.constant 0.00999999977 : f32
    %70 = vector.broadcast %cst_35 : f32 to vector<4x1xf32>
    %71 = arith.divf %69, %70 : vector<4x1xf32>
    %cst_36 = arith.constant 0.000000e+00 : f32
    %cst_37 = arith.constant 1.000000e+00 : f32
    %72 = vector.broadcast %cst_36 : f32 to vector<4x1xf32>
    %73 = arith.maximumf %72, %71 : vector<4x1xf32>
    %74 = vector.broadcast %cst_37 : f32 to vector<4x1xf32>
    %75 = arith.minimumf %74, %73 : vector<4x1xf32>
    %76 = arith.mulf %68, %75 : vector<4x1xf32>
    %77 = vector.broadcast %76 : vector<4x1xf32> to vector<4x40xf32>
    %78 = vector.broadcast %13 : vector<1x40xf32> to vector<4x40xf32>
    %79 = arith.mulf %77, %78 : vector<4x40xf32>
    %80 = vector.extract_strided_slice %23 {offsets = [0, 0], sizes = [4, 40], strides = [1, 1]} : vector<8x40xf32> to vector<4x40xf32>
    %cst_38 = arith.constant 0.000000e+00 : f32
    %81 = vector.broadcast %cst_38 : f32 to vector<4x40xf32>
    %82 = arith.cmpf ogt, %80, %81 : vector<4x40xf32>
    %cst_39 = arith.constant 0.000000e+00 : f32
    %83 = vector.broadcast %cst_39 : f32 to vector<4x40xf32>
    %84 = arith.select %82, %79, %83 : vector<4x40xi1>, vector<4x40xf32>
    %cst_40 = arith.constant dense<0.000000e+00> : vector<4x40xf32>
    %85 = tpu.matmul %84, %9, %cst_40 {dimension_numbers = #tpu.dot_dimension_numbers<[1], [0], [0], [1], [0, 0, 1, 1], [], []>} : vector<4x40xf32>, vector<40x40xf32>, vector<4x40xf32> -> vector<4x40xf32>
    %86 = vector.extract_strided_slice %18 {offsets = [0, 0], sizes = [4, 40], strides = [1, 1]} : vector<8x40xf32> to vector<4x40xf32>
    %cst_41 = arith.constant 0.000000e+00 : f32
    %87 = vector.broadcast %cst_41 : f32 to vector<4x40xf32>
    %88 = arith.cmpf ogt, %86, %87 : vector<4x40xf32>
    %cst_42 = arith.constant 0.000000e+00 : f32
    %89 = vector.broadcast %cst_42 : f32 to vector<4x40xf32>
    %90 = arith.select %88, %85, %89 : vector<4x40xi1>, vector<4x40xf32>
    %cst_43 = arith.constant dense<0.000000e+00> : vector<4x8xf32>
    %91 = tpu.matmul %90, %10, %cst_43 {dimension_numbers = #tpu.dot_dimension_numbers<[1], [0], [0], [1], [0, 0, 1, 1], [], []>} : vector<4x40xf32>, vector<40x8xf32>, vector<4x8xf32> -> vector<4x8xf32>
    %cst_44 = arith.constant 2.000000e-02 : f32
    %92 = vector.broadcast %cst_44 : f32 to vector<4x8xf32>
    %93 = arith.mulf %92, %0 : vector<4x8xf32>
    %94 = arith.addf %91, %93 : vector<4x8xf32>
    %cst_45 = arith.constant 0.000000e+00 : f32
    %95 = vector.broadcast %cst_45 : f32 to vector<4x1xf32>
    %96 = arith.subf %95, %60 : vector<4x1xf32>
    %cst_46 = arith.constant 0.000000e+00 : f32
    %97 = vector.broadcast %cst_46 : f32 to vector<4x1xf32>
    %98 = arith.maximumf %96, %97 : vector<4x1xf32>
    %cst_47 = arith.constant 0.000000e+00 : f32
    %99 = vector.broadcast %cst_47 : f32 to vector<4x8xf32>
    %100 = arith.maximumf %94, %99 : vector<4x8xf32>
    %cst_48 = arith.constant 2.000000e+00 : f32
    %101 = vector.broadcast %cst_48 : f32 to vector<4x8xf32>
    %102 = arith.mulf %101, %100 : vector<4x8xf32>
    %103 = vector.broadcast %98 : vector<4x1xf32> to vector<4x8xf32>
    %104 = arith.addf %103, %102 : vector<4x8xf32>
    %105 = vector.shape_cast %104 : vector<4x8xf32> to vector<1x4x8xf32>
    %cst_49 = arith.constant dense<0.000000e+00> : vector<1xf32>
    %106 = vector.multi_reduction <add>, %105, %cst_49 [1, 2] : vector<1x4x8xf32> to vector<1xf32>
    %107 = vector.shape_cast %106 : vector<1xf32> to vector<1x1x1xf32>
    %108 = vector.extract %107[0, 0, 0] : f32 from vector<1x1x1xf32>
    %cst_50 = arith.constant 3.125000e-02 : f32
    %109 = arith.mulf %108, %cst_50 : f32
    %110 = arith.mulf %61, %61 : vector<4x1xf32>
    %111 = vector.shape_cast %110 : vector<4x1xf32> to vector<1x4x1xf32>
    %cst_51 = arith.constant dense<0.000000e+00> : vector<1xf32>
    %112 = vector.multi_reduction <add>, %111, %cst_51 [1, 2] : vector<1x4x1xf32> to vector<1xf32>
    %113 = vector.shape_cast %112 : vector<1xf32> to vector<1x1x1xf32>
    %114 = vector.extract %113[0, 0, 0] : f32 from vector<1x1x1xf32>
    %cst_52 = arith.constant 1.000000e+01 : f32
    %115 = arith.mulf %cst_52, %114 : f32
    %116 = arith.addf %109, %115 : f32
    %c0_53 = arith.constant 0 : index
    %c0_54 = arith.constant 0 : index
    %117 = memref.load %arg3[%c0_53, %c0_54] : memref<1x1xf32, #tpu.memory_space<smem>>
    memref.store %116, %arg3[%c0_53, %c0_54] : memref<1x1xf32, #tpu.memory_space<smem>>
    return
  }
}

</mosaic_0001>

<llo_original>
// kernel: tpu_custom_call.1
$region0: #{tpu_custom_call.1}
  #allocation0 [shape = 'u32[]', space=smem, size = 0x4, offset = 0x4, fixed_abs, tag = 'smem constant byte address 0x4 - core index']
  #allocation1 [shape = 'u32[144,128]{1,0:T(1,128)}', space=vmem, size = 0x12000, scoped, tag = 'internal scratch']
  #allocation2 [shape = 'f32[8,8]{1,0:T(8,128)}', space=vmem, size = 0x1000, scoped, tag = 'scratch operand']
  %s0 = inlined_call_operand.hbm [shape: f32[4,8], index: 0, kind: input, shape index: {}]
  %s1 = inlined_call_operand.hbm [shape: f32[4,8], index: 1, kind: input, shape index: {}]
  %s2 = inlined_call_operand.hbm [shape: f32[136,128], index: 2, kind: input, shape index: {}]
  %s3 = inlined_call_operand.hbm [shape: f32[1,1], index: 3, kind: output, shape index: {}]
  %s4 = sld [smem:[#allocation0]]
  $region34: #{tpu_custom_call.1} parent=0
    _
  %s6 = ssub.s32 1, %s4
  %s7 = scalar_select 0, %s6, %s4
  $region1: #{tpu_custom_call.1} parent=0
    #allocation3 [shape = 'u8[2048]{0}', space=vmem, size = 0x800, scoped, tag = 'input window, operand 0, single buffered']
    #allocation4 [shape = 's32[1]{0}', space=sflag, size = 0x4, scoped, tag = 'scoped memory for tpu_custom_call.1']
    #allocation5 [shape = 's32[1]{0}', space=sflag, size = 0x4, scoped, tag = 'scoped memory for tpu_custom_call.1']
    #allocation6 [shape = 'u8[2048]{0}', space=vmem, size = 0x800, scoped, tag = 'input window, operand 1, single buffered']
    #allocation7 [shape = 's32[1]{0}', space=sflag, size = 0x4, scoped, tag = 'scoped memory for tpu_custom_call.1']
    #allocation8 [shape = 'u8[69632]{0}', space=vmem, size = 0x11000, scoped, tag = 'input window, operand 2, single buffered']
    #allocation9 [shape = 'u8[512]{0}', space=smem, size = 0x200, scoped, tag = 'output window, operand 0, single buffered']
    %8 = vsyncpa [#allocation4], 0
    %9 = vsyncpa [#allocation7], 0
    %10 = vsyncpa [#allocation5], 0
    // Predicated region
    $region2: #{tpu_custom_call.1} parent=1 // pred_check
      _
    $region3: #{tpu_custom_call.1} parent=1 // pred_check_branch
      %12 = sbr.rel (0) target = $region5
    $region4: #{tpu_custom_call.1} parent=1 // pred_region
      %s14 = ssub.s32 64, 64
      %15 = vsyncadd [#allocation4], %s14
      %s17 = sshll.u32 [#allocation3], 4
      %s18 = int_to_ptr.vmem [resolvable:$true] %s17
      %20 = dma.hbm_to_vmem [thread:$0]  %s0, 64, %s18, [#allocation4]
    $region5: #{tpu_custom_call.1} parent=1 // pred_fallthru
      _
    // Predicated region
    $region6: #{tpu_custom_call.1} parent=1 // pred_check
      _
    $region7: #{tpu_custom_call.1} parent=1 // pred_check_branch
      %22 = sbr.rel (0) target = $region9
    $region8: #{tpu_custom_call.1} parent=1 // pred_region
      %s24 = ssub.s32 64, 64
      %25 = vsyncadd [#allocation7], %s24
      %s27 = sshll.u32 [#allocation6], 4
      %s28 = int_to_ptr.vmem [resolvable:$true] %s27
      %30 = dma.hbm_to_vmem [thread:$0]  %s1, 64, %s28, [#allocation7]
    $region9: #{tpu_custom_call.1} parent=1 // pred_fallthru
      _
    // Predicated region
    $region10: #{tpu_custom_call.1} parent=1 // pred_check
      _
    $region11: #{tpu_custom_call.1} parent=1 // pred_check_branch
      %32 = sbr.rel (0) target = $region13
    $region12: #{tpu_custom_call.1} parent=1 // pred_region
      %s34 = ssub.s32 2176, 2176
      %35 = vsyncadd [#allocation7], %s34
      %s36 = sshll.u32 [#allocation8], 4
      %s37 = int_to_ptr.vmem [resolvable:$true] %s36
      %42 = dma.hbm_to_vmem [thread:$0]  %s2, 2176, %s37, [#allocation7], 128, 128, 8
    $region13: #{tpu_custom_call.1} parent=1 // pred_fallthru
      _
    // Predicated region
    $region14: #{tpu_custom_call.1} parent=1 // pred_check
      _
    $region15: #{tpu_custom_call.1} parent=1 // pred_check_branch
      %44 = sbr.rel (0) target = $region17
    $region16: #{tpu_custom_call.1} parent=1 // pred_region
      %45 = dma.done [#allocation4], 64
    $region17: #{tpu_custom_call.1} parent=1 // pred_fallthru
      _
    // Predicated region
    $region18: #{tpu_custom_call.1} parent=1 // pred_check
      _
    $region19: #{tpu_custom_call.1} parent=1 // pred_check_branch
      %47 = sbr.rel (0) target = $region21
    $region20: #{tpu_custom_call.1} parent=1 // pred_region
      %48 = dma.done [#allocation7], 64
    $region21: #{tpu_custom_call.1} parent=1 // pred_fallthru
      _
    // Predicated region
    $region22: #{tpu_custom_call.1} parent=1 // pred_check
      _
    $region23: #{tpu_custom_call.1} parent=1 // pred_check_branch
      %50 = sbr.rel (0) target = $region25
    $region24: #{tpu_custom_call.1} parent=1 // pred_region
      %51 = dma.done [#allocation7], 2176
    $region25: #{tpu_custom_call.1} parent=1 // pred_fallthru
      _
    %v52 = vld [vmem:[#allocation3] sm:$0xf]
    %v53 = vld [vmem:[#allocation6] sm:$0xf]
    %vm54 = vcmask 60416
    %55 = vst.msk [vmem:[#allocation2] sm:$0xf] %vm54, %v52
    %v56 = vsub.f32 %v52, %v53
    %v57 = vand.u32 2147483647, %v56
    %58 = vst.msk [vmem:[#allocation2 + $0x4] sm:$0xf] %vm54, %v57
    %v59 = vld [vmem:[#allocation2] sm:$0xff]
    %v60 = vld [vmem:[#allocation8] sm:$0xff]
    %v61 = vld [vmem:[#allocation8 + $0x8] sm:$0xff]
    %v62 = vld [vmem:[#allocation8 + $0x10] sm:$0xff]
    %v63 = vld [vmem:[#allocation8 + $0x18] sm:$0xff]
    %v64 = vld [vmem:[#allocation8 + $0x20] sm:$0xff]
    %v65 = vld [vmem:[#allocation8 + $0x28] sm:$0xff]
    %v66 = vld [vmem:[#allocation8 + $0x30] sm:$0xff]
    %v67 = vld [vmem:[#allocation8 + $0x38] sm:$0xff]
    %v68 = vld [vmem:[#allocation8 + $0x40] sm:$0xff]
    %v69 = vld [vmem:[#allocation8 + $0x48] sm:$0xff]
    %v70 = vld [vmem:[#allocation8 + $0x50] sm:$0xff]
    %v71 = vld [vmem:[#allocation8 + $0x58] sm:$0xff]
    %v72 = vld [vmem:[#allocation8 + $0x60] sm:$0xff]
    %v73 = vld [vmem:[#allocation8 + $0x68] sm:$0xff]
    %v74 = vld [vmem:[#allocation8 + $0x70] sm:$0xff]
    %v75 = vld [vmem:[#allocation8 + $0x78] sm:$0xff]
    %v76 = vld [vmem:[#allocation8 + $0x80] sm:$0x1]
    %v77 = vld [vmem:[#allocation8 + $0x81] sm:$0x1]
    %v78 = vld [vmem:[#allocation8 + $0x82] sm:$0x1]
    %v79 = vld [vmem:[#allocation8 + $0x83] sm:$0x1]
    %v80 = vld [vmem:[#allocation8 + $0x84] sm:$0x1]
    %v81 = vlaneseq
    %v82 = vshrl.u32 %v81, 7
    %v83 = vsub.s32 0, %v82
    %v84 = vrot.slane %v76, %v83
    %vm85 = vcmask 64512
    %v87 = vsel %vm85, %v59, 0
    %89 = vmatprep.subr.mxu0 0.0
    %90 = vmatpush1.msra.mxu0 0.0
    %91 = vmatprep.subr.mxu0 0.0
    %92 = vmatpush1.msra.mxu0 0.0
    %93 = vmatprep.subr.mxu0 0.0
    %94 = vmatpush1.msra.mxu0 0.0
    %95 = vmatprep.subr.mxu0 0.0
    %96 = vmatpush1.msra.mxu0 0.0
    %97 = vmatprep.subr.mxu0 0.0
    %98 = vmatpush1.msra.mxu0 0.0
    %99 = vmatprep.subr.mxu0 0.0
    %100 = vmatpush1.msra.mxu0 0.0
    %101 = vmatprep.subr.mxu0 0.0
    %102 = vmatpush1.msra.mxu0 0.0
    %103 = vmatprep.subr.mxu0 0.0
    %104 = vmatpush1.msra.mxu0 0.0
    %105 = vmatprep.subr.mxu0 0.0
    %106 = vmatpush1.msra.mxu0 0.0
    %107 = vmatprep.subr.mxu0 0.0
    %108 = vmatpush1.msra.mxu0 0.0
    %109 = vmatprep.subr.mxu0 0.0
    %110 = vmatpush1.msra.mxu0 0.0
    %111 = vmatprep.subr.mxu0 0.0
    %112 = vmatpush1.msra.mxu0 0.0
    %113 = vmatprep.subr.mxu0 0.0
    %114 = vmatpush1.msra.mxu0 0.0
    %115 = vmatprep.subr.mxu0 0.0
    %116 = vmatpush1.msra.mxu0 0.0
    %117 = vmatprep.subr.mxu0 0.0
    %118 = vmatpush1.msra.mxu0 0.0
    %119 = vmatprep.subr.mxu0 0.0
    %120 = vmatpush1.msra.mxu0 %v60
    %121 = vmatprep.subr.mxu0 0.0
    %122 = vmatpush2.msra.mxu0 0.0
    %123 = vmatprep.subr.mxu0 0.0
    %124 = vmatpush2.msra.mxu0 0.0
    %125 = vmatprep.subr.mxu0 0.0
    %126 = vmatpush2.msra.mxu0 0.0
    %127 = vmatprep.subr.mxu0 0.0
    %128 = vmatpush2.msra.mxu0 0.0
    %129 = vmatprep.subr.mxu0 0.0
    %130 = vmatpush2.msra.mxu0 0.0
    %131 = vmatprep.subr.mxu0 0.0
    %132 = vmatpush2.msra.mxu0 0.0
    %133 = vmatprep.subr.mxu0 0.0
    %134 = vmatpush2.msra.mxu0 0.0
    %135 = vmatprep.subr.mxu0 0.0
    %136 = vmatpush2.msra.mxu0 0.0
    %137 = vmatprep.subr.mxu0 0.0
    %138 = vmatpush2.msra.mxu0 0.0
    %139 = vmatprep.subr.mxu0 0.0
    %140 = vmatpush2.msra.mxu0 0.0
    %141 = vmatprep.subr.mxu0 0.0
    %142 = vmatpush2.msra.mxu0 0.0
    %143 = vmatprep.subr.mxu0 0.0
    %144 = vmatpush2.msra.mxu0 0.0
    %145 = vmatprep.subr.mxu0 0.0
    %146 = vmatpush2.msra.mxu0 0.0
    %147 = vmatprep.subr.mxu0 0.0
    %148 = vmatpush2.msra.mxu0 0.0
    %149 = vmatprep.subr.mxu0 0.0
    %150 = vmatpush2.msra.mxu0 0.0
    %151 = vmatprep.subr.mxu0 0.0
    %152 = vmatpush2.msra.mxu0 0.0
    %153 = vmatprep.mubr.f32.mxu0 0.0
    %154 = vmatmul.mubr.f32.gmra.mxu0 %v87
    %v155 = vpop.f32.mrf.mxu0
    %v156 = vadd.f32 %v84, %v155
    %v157 = vpop.f32.mrf.mxu0
    %158 = vdwg.mxu0
    %v159 = vmax.f32 %v156, 0.0
    %v160 = vlaneseq
    %v161 = vshrl.u32 %v160, 7
    %v162 = vsub.s32 0, %v161
    %v163 = vrot.slane %v77, %v162
    %vm164 = vcmask 326656
    %v166 = vsel %vm164, %v159, 0
    %168 = vmatprep.subr.mxu0 0.0
    %169 = vmatpush1.msra.mxu0 0.0
    %170 = vmatprep.subr.mxu0 0.0
    %171 = vmatpush1.msra.mxu0 0.0
    %172 = vmatprep.subr.mxu0 0.0
    %173 = vmatpush1.msra.mxu0 0.0
    %174 = vmatprep.subr.mxu0 0.0
    %175 = vmatpush1.msra.mxu0 0.0
    %176 = vmatprep.subr.mxu0 0.0
    %177 = vmatpush1.msra.mxu0 0.0
    %178 = vmatprep.subr.mxu0 0.0
    %179 = vmatpush1.msra.mxu0 0.0
    %180 = vmatprep.subr.mxu0 0.0
    %181 = vmatpush1.msra.mxu0 0.0
    %182 = vmatprep.subr.mxu0 0.0
    %183 = vmatpush1.msra.mxu0 0.0
    %184 = vmatprep.subr.mxu0 0.0
    %185 = vmatpush1.msra.mxu0 0.0
    %186 = vmatprep.subr.mxu0 0.0
    %187 = vmatpush1.msra.mxu0 0.0
    %188 = vmatprep.subr.mxu0 0.0
    %189 = vmatpush1.msra.mxu0 0.0
    %190 = vmatprep.subr.mxu0 0.0
    %191 = vmatpush1.msra.mxu0 %v65
    %192 = vmatprep.subr.mxu0 0.0
    %193 = vmatpush1.msra.mxu0 %v64
    %194 = vmatprep.subr.mxu0 0.0
    %195 = vmatpush1.msra.mxu0 %v63
    %196 = vmatprep.subr.mxu0 0.0
    %197 = vmatpush1.msra.mxu0 %v62
    %198 = vmatprep.subr.mxu0 0.0
    %199 = vmatpush1.msra.mxu0 %v61
    %200 = vmatprep.subr.mxu0 0.0
    %201 = vmatpush2.msra.mxu0 0.0
    %202 = vmatprep.subr.mxu0 0.0
    %203 = vmatpush2.msra.mxu0 0.0
    %204 = vmatprep.subr.mxu0 0.0
    %205 = vmatpush2.msra.mxu0 0.0
    %206 = vmatprep.subr.mxu0 0.0
    %207 = vmatpush2.msra.mxu0 0.0
    %208 = vmatprep.subr.mxu0 0.0
    %209 = vmatpush2.msra.mxu0 0.0
    %210 = vmatprep.subr.mxu0 0.0
    %211 = vmatpush2.msra.mxu0 0.0
    %212 = vmatprep.subr.mxu0 0.0
    %213 = vmatpush2.msra.mxu0 0.0
    %214 = vmatprep.subr.mxu0 0.0
    %215 = vmatpush2.msra.mxu0 0.0
    %216 = vmatprep.subr.mxu0 0.0
    %217 = vmatpush2.msra.mxu0 0.0
    %218 = vmatprep.subr.mxu0 0.0
    %219 = vmatpush2.msra.mxu0 0.0
    %220 = vmatprep.subr.mxu0 0.0
    %221 = vmatpush2.msra.mxu0 0.0
    %222 = vmatprep.subr.mxu0 0.0
    %223 = vmatpush2.msra.mxu0 0.0
    %224 = vmatprep.subr.mxu0 0.0
    %225 = vmatpush2.msra.mxu0 0.0
    %226 = vmatprep.subr.mxu0 0.0
    %227 = vmatpush2.msra.mxu0 0.0
    %228 = vmatprep.subr.mxu0 0.0
    %229 = vmatpush2.msra.mxu0 0.0
    %230 = vmatprep.subr.mxu0 0.0
    %231 = vmatpush2.msra.mxu0 0.0
    %232 = vmatprep.mubr.f32.mxu0 0.0
    %233 = vmatmul.mubr.f32.gmra.mxu0 %v166
    %v234 = vpop.f32.mrf.mxu0
    %v235 = vadd.f32 %v163, %v234
    %v236 = vpop.f32.mrf.mxu0
    %237 = vdwg.mxu0
    %v238 = vmax.f32 %v235, 0.0
    %v239 = vlaneseq
    %v240 = vshrl.u32 %v239, 7
    %v241 = vsub.s32 0, %v240
    %v242 = vrot.slane %v78, %v241
    %v243 = vmul.f32 %v238, %v242
    %v244 = vsel %vm164, %v243, 0.0
    %245 = vadd.xlane.f32.xlu0 %v244
    %v246 = vpop.xlane.xlu0 %245
    %v247 = vlaneseq
    %v248 = vshrl.u32 %v247, 7
    %v249 = vsub.s32 0, %v248
    %v250 = vrot.slane %v79, %v249
    %v251 = vadd.f32 %v246, %v250
    %v252 = vmax.f32 %v251, 0.0
    %v253 = vmul.f32 %v252, 50.0
    %v254 = vmul.f32 %v253, %v252
    %v255 = vmin.f32 %v254, 0.005
    %v256 = vsub.f32 %v251, 0.005
    %v257 = vmax.f32 %v255, %v256
    %v258 = vlaneseq
    %v259 = vshrl.u32 %v258, 7
    %v260 = vsub.s32 0, %v259
    %v261 = vrot.slane %v80, %v260
    %v262 = vsub.f32 %v257, %v261
    %v263 = vmax.f32 %v262, 0.0
    %v264 = vmul.f32 %v263, 0.5
    %v265 = vmul.f32 %v264, %v263
    %v266 = vmin.f32 %v265, 0.5
    %v267 = vsub.f32 %v262, 0.5
    %v268 = vmax.f32 %v266, %v267
    %v269 = vmul.f32 %v59, %v59
    %v270 = vsel %vm85, %v269, 0.0
    %271 = vadd.xlane.f32.xlu0 %v270
    %v272 = vpop.xlane.xlu0 %271
    %v273 = vmul.f32 %v272, 0.01
    %v274 = vadd.f32 %v268, %v273
    %v275 = vmin.f32 %v263, 1.0
    %v276 = vrcp.pop 0.01
    %v277 = vmul.f32 %v251, %v276
    %v278 = vmax.f32 %v277, 0.0
    %v279 = vmin.f32 %v278, 1.0
    %v280 = vmul.f32 %v275, %v279
    %282 = vset.pattern.permute.xlu0 0
    %283 = vperm.xlu0 %282, %v280
    %v284 = vpop.permute.xlu0 %283
    %v286 = vmul.f32 %v284, %v242
    %vm287 = vcmp.gt.f32.partialorder %v235, 0.0
    %v288 = vsel %vm287, %v286, 0.0
    %v290 = vsel %vm164, %v288, 0
    %292 = vmatprep.subr.mxu0 0.0
    %293 = vmatpush1.msra.mxu0 0.0
    %294 = vmatprep.subr.mxu0 0.0
    %295 = vmatpush1.msra.mxu0 0.0
    %296 = vmatprep.subr.mxu0 0.0
    %297 = vmatpush1.msra.mxu0 0.0
    %298 = vmatprep.subr.mxu0 0.0
    %299 = vmatpush1.msra.mxu0 0.0
    %300 = vmatprep.subr.mxu0 0.0
    %301 = vmatpush1.msra.mxu0 0.0
    %302 = vmatprep.subr.mxu0 0.0
    %303 = vmatpush1.msra.mxu0 0.0
    %304 = vmatprep.subr.mxu0 0.0
    %305 = vmatpush1.msra.mxu0 0.0
    %306 = vmatprep.subr.mxu0 0.0
    %307 = vmatpush1.msra.mxu0 0.0
    %308 = vmatprep.subr.mxu0 0.0
    %309 = vmatpush1.msra.mxu0 0.0
    %310 = vmatprep.subr.mxu0 0.0
    %311 = vmatpush1.msra.mxu0 0.0
    %312 = vmatprep.subr.mxu0 0.0
    %313 = vmatpush1.msra.mxu0 0.0
    %314 = vmatprep.subr.mxu0 0.0
    %315 = vmatpush1.msra.mxu0 %v70
    %316 = vmatprep.subr.mxu0 0.0
    %317 = vmatpush1.msra.mxu0 %v69
    %318 = vmatprep.subr.mxu0 0.0
    %319 = vmatpush1.msra.mxu0 %v68
    %320 = vmatprep.subr.mxu0 0.0
    %321 = vmatpush1.msra.mxu0 %v67
    %322 = vmatprep.subr.mxu0 0.0
    %323 = vmatpush1.msra.mxu0 %v66
    %324 = vmatprep.subr.mxu0 0.0
    %325 = vmatpush2.msra.mxu0 0.0
    %326 = vmatprep.subr.mxu0 0.0
    %327 = vmatpush2.msra.mxu0 0.0
    %328 = vmatprep.subr.mxu0 0.0
    %329 = vmatpush2.msra.mxu0 0.0
    %330 = vmatprep.subr.mxu0 0.0
    %331 = vmatpush2.msra.mxu0 0.0
    %332 = vmatprep.subr.mxu0 0.0
    %333 = vmatpush2.msra.mxu0 0.0
    %334 = vmatprep.subr.mxu0 0.0
    %335 = vmatpush2.msra.mxu0 0.0
    %336 = vmatprep.subr.mxu0 0.0
    %337 = vmatpush2.msra.mxu0 0.0
    %338 = vmatprep.subr.mxu0 0.0
    %339 = vmatpush2.msra.mxu0 0.0
    %340 = vmatprep.subr.mxu0 0.0
    %341 = vmatpush2.msra.mxu0 0.0
    %342 = vmatprep.subr.mxu0 0.0
    %343 = vmatpush2.msra.mxu0 0.0
    %344 = vmatprep.subr.mxu0 0.0
    %345 = vmatpush2.msra.mxu0 0.0
    %346 = vmatprep.subr.mxu0 0.0
    %347 = vmatpush2.msra.mxu0 0.0
    %348 = vmatprep.subr.mxu0 0.0
    %349 = vmatpush2.msra.mxu0 0.0
    %350 = vmatprep.subr.mxu0 0.0
    %351 = vmatpush2.msra.mxu0 0.0
    %352 = vmatprep.subr.mxu0 0.0
    %353 = vmatpush2.msra.mxu0 0.0
    %354 = vmatprep.subr.mxu0 0.0
    %355 = vmatpush2.msra.mxu0 0.0
    %356 = vmatprep.mubr.f32.mxu0 0.0
    %357 = vmatmul.mubr.f32.gmra.mxu0 %v290
    %v358 = vpop.f32.mrf.mxu0
    %v359 = vadd.f32 0.0, %v358
    %v360 = vpop.f32.mrf.mxu0
    %361 = vdwg.mxu0
    %vm362 = vcmp.gt.f32.partialorder %v156, 0.0
    %v363 = vsel %vm362, %v359, 0.0
    %v364 = vmul.f32 %v52, 0.02
    %v366 = vsel %vm164, %v363, 0
    %368 = vmatprep.subr.mxu0 0.0
    %369 = vmatpush1.msra.mxu0 0.0
    %370 = vmatprep.subr.mxu0 0.0
    %371 = vmatpush1.msra.mxu0 0.0
    %372 = vmatprep.subr.mxu0 0.0
    %373 = vmatpush1.msra.mxu0 0.0
    %374 = vmatprep.subr.mxu0 0.0
    %375 = vmatpush1.msra.mxu0 0.0
    %376 = vmatprep.subr.mxu0 0.0
    %377 = vmatpush1.msra.mxu0 0.0
    %378 = vmatprep.subr.mxu0 0.0
    %379 = vmatpush1.msra.mxu0 0.0
    %380 = vmatprep.subr.mxu0 0.0
    %381 = vmatpush1.msra.mxu0 0.0
    %382 = vmatprep.subr.mxu0 0.0
    %383 = vmatpush1.msra.mxu0 0.0
    %384 = vmatprep.subr.mxu0 0.0
    %385 = vmatpush1.msra.mxu0 0.0
    %386 = vmatprep.subr.mxu0 0.0
    %387 = vmatpush1.msra.mxu0 0.0
    %388 = vmatprep.subr.mxu0 0.0
    %389 = vmatpush1.msra.mxu0 0.0
    %390 = vmatprep.subr.mxu0 0.0
    %391 = vmatpush1.msra.mxu0 %v75
    %392 = vmatprep.subr.mxu0 0.0
    %393 = vmatpush1.msra.mxu0 %v74
    %394 = vmatprep.subr.mxu0 0.0
    %395 = vmatpush1.msra.mxu0 %v73
    %396 = vmatprep.subr.mxu0 0.0
    %397 = vmatpush1.msra.mxu0 %v72
    %398 = vmatprep.subr.mxu0 0.0
    %399 = vmatpush1.msra.mxu0 %v71
    %400 = vmatprep.subr.mxu0 0.0
    %401 = vmatpush2.msra.mxu0 0.0
    %402 = vmatprep.subr.mxu0 0.0
    %403 = vmatpush2.msra.mxu0 0.0
    %404 = vmatprep.subr.mxu0 0.0
    %405 = vmatpush2.msra.mxu0 0.0
    %406 = vmatprep.subr.mxu0 0.0
    %407 = vmatpush2.msra.mxu0 0.0
    %408 = vmatprep.subr.mxu0 0.0
    %409 = vmatpush2.msra.mxu0 0.0
    %410 = vmatprep.subr.mxu0 0.0
    %411 = vmatpush2.msra.mxu0 0.0
    %412 = vmatprep.subr.mxu0 0.0
    %413 = vmatpush2.msra.mxu0 0.0
    %414 = vmatprep.subr.mxu0 0.0
    %415 = vmatpush2.msra.mxu0 0.0
    %416 = vmatprep.subr.mxu0 0.0
    %417 = vmatpush2.msra.mxu0 0.0
    %418 = vmatprep.subr.mxu0 0.0
    %419 = vmatpush2.msra.mxu0 0.0
    %420 = vmatprep.subr.mxu0 0.0
    %421 = vmatpush2.msra.mxu0 0.0
    %422 = vmatprep.subr.mxu0 0.0
    %423 = vmatpush2.msra.mxu0 0.0
    %424 = vmatprep.subr.mxu0 0.0
    %425 = vmatpush2.msra.mxu0 0.0
    %426 = vmatprep.subr.mxu0 0.0
    %427 = vmatpush2.msra.mxu0 0.0
    %428 = vmatprep.subr.mxu0 0.0
    %429 = vmatpush2.msra.mxu0 0.0
    %430 = vmatprep.subr.mxu0 0.0
    %431 = vmatpush2.msra.mxu0 0.0
    %432 = vmatprep.mubr.f32.mxu0 0.0
    %433 = vmatmul.mubr.f32.gmra.mxu0 %v366
    %v434 = vpop.f32.mrf.mxu0
    %v435 = vadd.f32 %v364, %v434
    %v436 = vpop.f32.mrf.mxu0
    %437 = vdwg.mxu0
    %v438 = vsub.f32 0.0, %v274
    %v439 = vmax.f32 %v438, 0.0
    %v440 = vmax.f32 %v435, 0.0
    %v441 = vmul.f32 %v440, 2.0
    %443 = vset.pattern.permute.xlu0 0
    %444 = vperm.xlu0 %443, %v439
    %v445 = vpop.permute.xlu0 %444
    %v447 = vadd.f32 %v445, %v441
    %v448 = vsel %vm54, %v447, 0.0
    %449 = vadd.xlane.f32.xlu0 %v448
    %v450 = vpop.xlane.xlu0 %449
    %v451 = vrot.slane %v450, 4
    %v452 = vadd.f32 %v450, %v451
    %v453 = vrot.slane %v452, 2
    %v454 = vadd.f32 %v452, %v453
    %v455 = vrot.slane %v454, 1
    %v456 = vadd.f32 %v454, %v455
    %s457 = vtos %v456
    %s458 = smul.f32 %s457, 0.03125
    %v459 = vmul.f32 %v274, %v274
    %v461 = vrot.slane %v459, 4
    %vm463 = vcmask 3072
    %v464 = vsel %vm463, %v461, 0.0
    %465 = vadd.xlane.f32.xlu0 %v464
    %v466 = vpop.xlane.xlu0 %465
    %v467 = vrot.slane %v466, 4
    %v468 = vadd.f32 %v466, %v467
    %v469 = vrot.slane %v468, 2
    %v470 = vadd.f32 %v468, %v469
    %v471 = vrot.slane %v470, 1
    %v472 = vadd.f32 %v470, %v471
    %s473 = vtos %v472
    %s474 = smul.f32 %s473, 10.0
    %s475 = sadd.f32 %s458, %s474
    %s476 = scalar_lea.smem [#allocation9], 0
    %477 = sst [smem:[%s476]] %s475
    // Predicated region
    $region26: #{tpu_custom_call.1} parent=1 // pred_check
      _
    $region27: #{tpu_custom_call.1} parent=1 // pred_check_branch
      %479 = sbr.rel (0) target = $region29
    $region28: #{tpu_custom_call.1} parent=1 // pred_region
      %s481 = ssub.s32 16, 16
      %482 = vsyncadd [#allocation5], %s481
      %485 = dma.smem_to_hbm [#allocation9], 16, %s3, [#allocation5]
    $region29: #{tpu_custom_call.1} parent=1 // pred_fallthru
      _
    // Predicated region
    $region30: #{tpu_custom_call.1} parent=1 // pred_check
      _
    $region31: #{tpu_custom_call.1} parent=1 // pred_check_branch
      %487 = sbr.rel (0) target = $region33
    $region32: #{tpu_custom_call.1} parent=1 // pred_region
      %488 = dma.done [#allocation5], 16
    $region33: #{tpu_custom_call.1} parent=1 // pred_fallthru
      _
    %489 = sfence
    %490 = vsyncpa [#allocation4], 1
    %491 = vsyncpa [#allocation7], 1
    %492 = vsyncpa [#allocation5], 1

</llo_original>
